<compile_context>
chip_gen: v7x
topology: tpu7x:2x2x1
jax: 0.10.0
libtpu: 0.0.40
codegen_flags: <defaults>
</compile_context>

<pallas_src>
import jax
import jax.numpy as jnp
from jax.experimental import pallas as pl
from jax.experimental.pallas import tpu as pltpu

IN_DIM = 28 * 28
HID = 64
OUT_DIM = 10


def _round_up(n, m):
    return ((n + m - 1) // m) * m


def mlp_kernel(x_ref, w1_ref, b1_ref, w2_ref, b2_ref, w3_ref, b3_ref,
               w4_ref, b4_ref, o_ref):
    # Biases (f32, shape (1, out)) — read once per tile, broadcast over rows.
    b1 = b1_ref[...]
    b2 = b2_ref[...]
    b3 = b3_ref[...]
    b4 = b4_ref[...]

    x = x_ref[...]                                   # (TILE_B, 784) bf16
    # fc1 + relu  (bf16 MXU inputs, f32 accumulate)
    h = jnp.dot(x, w1_ref[...], preferred_element_type=jnp.float32)
    h = jnp.maximum(h + b1, 0.0).astype(jnp.bfloat16)
    # fc2 + relu
    h = jnp.dot(h, w2_ref[...], preferred_element_type=jnp.float32)
    h = jnp.maximum(h + b2, 0.0).astype(jnp.bfloat16)
    # fc3 + relu
    h = jnp.dot(h, w3_ref[...], preferred_element_type=jnp.float32)
    h = jnp.maximum(h + b3, 0.0).astype(jnp.bfloat16)
    # fc4 logits (f32)
    logits = jnp.dot(h, w4_ref[...], preferred_element_type=jnp.float32) + b4
    # log_softmax over dim=1 (last dim), in f32.
    m = jnp.max(logits, axis=-1, keepdims=True)
    shifted = logits - m
    lse = jnp.log(jnp.sum(jnp.exp(shifted), axis=-1, keepdims=True))
    o_ref[...] = shifted - lse


def net_forward(x, params, *, tile_b=512):
    """x: (B, 784). params: dict of (in, out) weights and (1, out) biases (f32)."""
    B = x.shape[0]
    # Tile rows: multiple of 8 (sublane), capped at 512 so double-buffered
    # bf16 x tiles (~2 * tile_b * 784 * 2 B) fit every generation's scoped
    # VMEM default (v5e 16 MiB, v6e/v7x 32 MiB) with plenty of headroom.
    tile_b = min(tile_b, _round_up(B, 8))
    grid = (pl.cdiv(B, tile_b),)

    xb = x.astype(jnp.bfloat16)
    w1 = params["w1"].astype(jnp.bfloat16)
    w2 = params["w2"].astype(jnp.bfloat16)
    w3 = params["w3"].astype(jnp.bfloat16)
    w4 = params["w4"].astype(jnp.bfloat16)
    b1, b2, b3, b4 = params["b1"], params["b2"], params["b3"], params["b4"]

    def const_spec(shape):
        # Same block for every grid step -> stays VMEM resident.
        return pl.BlockSpec(shape, lambda i: (0, 0))

    in_specs = [
        pl.BlockSpec((tile_b, IN_DIM), lambda i: (i, 0)),   # x: tiled on batch
        const_spec((IN_DIM, HID)), const_spec((1, HID)),    # w1, b1
        const_spec((HID, HID)),    const_spec((1, HID)),    # w2, b2
        const_spec((HID, HID)),    const_spec((1, HID)),    # w3, b3
        const_spec((HID, OUT_DIM)), const_spec((1, OUT_DIM)),  # w4, b4
    ]
    out_spec = pl.BlockSpec((tile_b, OUT_DIM), lambda i: (i, 0))

    return pl.pallas_call(
        mlp_kernel,
        out_shape=jax.ShapeDtypeStruct((B, OUT_DIM), jnp.float32),
        grid=grid,
        in_specs=in_specs,
        out_specs=out_spec,
        compiler_params=pltpu.CompilerParams(
            dimension_semantics=("parallel",),   # batch tiles are independent
        ),
    )(xb, w1, b1, w2, b2, w3, b3, w4, b4)


def init_params(key):
    """Deterministic PyTorch-style init; weights stored transposed as (in, out)."""
    dims = [(IN_DIM, HID), (HID, HID), (HID, HID), (HID, OUT_DIM)]
    params = {}
    for i, (fan_in, fan_out) in enumerate(dims, start=1):
        key, kw, kb = jax.random.split(key, 3)
        bound = 1.0 / jnp.sqrt(jnp.float32(fan_in))
        params[f"w{i}"] = jax.random.uniform(
            kw, (fan_in, fan_out), jnp.float32, -bound, bound)
        params[f"b{i}"] = jax.random.uniform(
            kb, (1, fan_out), jnp.float32, -bound, bound)
    return params


def reference_forward(x, params):
    """JAX reference with the same bf16 inputs/weights + f32 accumulation."""
    def dot(a, w):
        return jnp.dot(a.astype(jnp.bfloat16), w.astype(jnp.bfloat16),
                       preferred_element_type=jnp.float32)
    h = jnp.maximum(dot(x, params["w1"]) + params["b1"], 0.0)
    h = jnp.maximum(dot(h, params["w2"]) + params["b2"], 0.0)
    h = jnp.maximum(dot(h, params["w3"]) + params["b3"], 0.0)
    logits = dot(h, params["w4"]) + params["b4"]
    return jax.nn.log_softmax(logits, axis=1)


if __name__ == "__main__":
    key = jax.random.PRNGKey(0)
    key, kx = jax.random.split(key)
    params = init_params(key)

    # Small test: single tile.
    B = 8
    x = jax.random.normal(kx, (B, IN_DIM), jnp.float32)
    out = jax.block_until_ready(net_forward(x, params))
    ref = reference_forward(x, params)
    assert out.shape == (B, OUT_DIM)
    assert jnp.allclose(out, ref, atol=1e-3, rtol=1e-3), "mismatch vs JAX ref (B=8)"

    # Ragged multi-tile test: grid of 3 with a partially filled last tile.
    key, kx2 = jax.random.split(key)
    B2 = 20
    x2 = jax.random.normal(kx2, (B2, IN_DIM), jnp.float32)
    out2 = jax.block_until_ready(net_forward(x2, params, tile_b=8))
    ref2 = reference_forward(x2, params)
    assert out2.shape == (B2, OUT_DIM)
    assert jnp.allclose(out2, ref2, atol=1e-3, rtol=1e-3), "mismatch vs JAX ref (ragged)"

    print("KERNEL_OK")
</pallas_src>

<mosaic_0001>
module attributes {stable_mosaic.version = 11 : i64} {
  func.func @mlp_kernel(%arg0: i32, %arg1: memref<8x784xbf16, #tpu.memory_space<vmem>>, %arg2: memref<784x64xbf16, #tpu.memory_space<vmem>>, %arg3: memref<1x64xf32, #tpu.memory_space<vmem>>, %arg4: memref<64x64xbf16, #tpu.memory_space<vmem>>, %arg5: memref<1x64xf32, #tpu.memory_space<vmem>>, %arg6: memref<64x64xbf16, #tpu.memory_space<vmem>>, %arg7: memref<1x64xf32, #tpu.memory_space<vmem>>, %arg8: memref<64x10xbf16, #tpu.memory_space<vmem>>, %arg9: memref<1x10xf32, #tpu.memory_space<vmem>>, %arg10: memref<8x10xf32, #tpu.memory_space<vmem>>) attributes {dimension_semantics = [#tpu.dimension_semantics<parallel>], iteration_bounds = array<i64: 1>, scalar_prefetch = 0 : i64, scratch_operands = 0 : i64, tpu.core_type = #tpu.core_type<tc>, window_params = [{transform_indices = @transform_0, window_bounds = array<i64: 8, 784>}, {pipeline_mode = #tpu.pipeline_mode<synchronous>, transform_indices = @transform_1, window_bounds = array<i64: 784, 64>}, {pipeline_mode = #tpu.pipeline_mode<synchronous>, transform_indices = @transform_2, window_bounds = array<i64: 1, 64>}, {pipeline_mode = #tpu.pipeline_mode<synchronous>, transform_indices = @transform_3, window_bounds = array<i64: 64, 64>}, {pipeline_mode = #tpu.pipeline_mode<synchronous>, transform_indices = @transform_4, window_bounds = array<i64: 1, 64>}, {pipeline_mode = #tpu.pipeline_mode<synchronous>, transform_indices = @transform_5, window_bounds = array<i64: 64, 64>}, {pipeline_mode = #tpu.pipeline_mode<synchronous>, transform_indices = @transform_6, window_bounds = array<i64: 1, 64>}, {pipeline_mode = #tpu.pipeline_mode<synchronous>, transform_indices = @transform_7, window_bounds = array<i64: 64, 10>}, {pipeline_mode = #tpu.pipeline_mode<synchronous>, transform_indices = @transform_8, window_bounds = array<i64: 1, 10>}, {transform_indices = @transform_9, window_bounds = array<i64: 8, 10>}]} {
    %c0 = arith.constant 0 : index
    %c0_0 = arith.constant 0 : index
    %0 = vector.load %arg3[%c0, %c0_0] : memref<1x64xf32, #tpu.memory_space<vmem>>, vector<1x64xf32>
    %c0_1 = arith.constant 0 : index
    %c0_2 = arith.constant 0 : index
    %1 = vector.load %arg5[%c0_1, %c0_2] : memref<1x64xf32, #tpu.memory_space<vmem>>, vector<1x64xf32>
    %c0_3 = arith.constant 0 : index
    %c0_4 = arith.constant 0 : index
    %2 = vector.load %arg7[%c0_3, %c0_4] : memref<1x64xf32, #tpu.memory_space<vmem>>, vector<1x64xf32>
    %c0_5 = arith.constant 0 : index
    %c0_6 = arith.constant 0 : index
    %3 = vector.load %arg9[%c0_5, %c0_6] : memref<1x10xf32, #tpu.memory_space<vmem>>, vector<1x10xf32>
    %c0_7 = arith.constant 0 : index
    %c0_8 = arith.constant 0 : index
    %4 = vector.load %arg1[%c0_7, %c0_8] : memref<8x784xbf16, #tpu.memory_space<vmem>>, vector<8x784xbf16>
    %c0_9 = arith.constant 0 : index
    %c0_10 = arith.constant 0 : index
    %5 = vector.load %arg2[%c0_9, %c0_10] : memref<784x64xbf16, #tpu.memory_space<vmem>>, vector<784x64xbf16>
    %cst = arith.constant dense<0.000000e+00> : vector<8x64xf32>
    %6 = tpu.matmul %4, %5, %cst {dimension_numbers = #tpu.dot_dimension_numbers<[1], [0], [0], [1], [0, 0, 1, 1], [], []>} : vector<8x784xbf16>, vector<784x64xbf16>, vector<8x64xf32> -> vector<8x64xf32>
    %7 = vector.broadcast %0 : vector<1x64xf32> to vector<8x64xf32>
    %8 = arith.addf %6, %7 : vector<8x64xf32>
    %cst_11 = arith.constant 0.000000e+00 : f32
    %9 = vector.broadcast %cst_11 : f32 to vector<8x64xf32>
    %10 = arith.maximumf %8, %9 : vector<8x64xf32>
    %11 = arith.truncf %10 : vector<8x64xf32> to vector<8x64xbf16>
    %c0_12 = arith.constant 0 : index
    %c0_13 = arith.constant 0 : index
    %12 = vector.load %arg4[%c0_12, %c0_13] : memref<64x64xbf16, #tpu.memory_space<vmem>>, vector<64x64xbf16>
    %cst_14 = arith.constant dense<0.000000e+00> : vector<8x64xf32>
    %13 = tpu.matmul %11, %12, %cst_14 {dimension_numbers = #tpu.dot_dimension_numbers<[1], [0], [0], [1], [0, 0, 1, 1], [], []>} : vector<8x64xbf16>, vector<64x64xbf16>, vector<8x64xf32> -> vector<8x64xf32>
    %14 = vector.broadcast %1 : vector<1x64xf32> to vector<8x64xf32>
    %15 = arith.addf %13, %14 : vector<8x64xf32>
    %cst_15 = arith.constant 0.000000e+00 : f32
    %16 = vector.broadcast %cst_15 : f32 to vector<8x64xf32>
    %17 = arith.maximumf %15, %16 : vector<8x64xf32>
    %18 = arith.truncf %17 : vector<8x64xf32> to vector<8x64xbf16>
    %c0_16 = arith.constant 0 : index
    %c0_17 = arith.constant 0 : index
    %19 = vector.load %arg6[%c0_16, %c0_17] : memref<64x64xbf16, #tpu.memory_space<vmem>>, vector<64x64xbf16>
    %cst_18 = arith.constant dense<0.000000e+00> : vector<8x64xf32>
    %20 = tpu.matmul %18, %19, %cst_18 {dimension_numbers = #tpu.dot_dimension_numbers<[1], [0], [0], [1], [0, 0, 1, 1], [], []>} : vector<8x64xbf16>, vector<64x64xbf16>, vector<8x64xf32> -> vector<8x64xf32>
    %21 = vector.broadcast %2 : vector<1x64xf32> to vector<8x64xf32>
    %22 = arith.addf %20, %21 : vector<8x64xf32>
    %cst_19 = arith.constant 0.000000e+00 : f32
    %23 = vector.broadcast %cst_19 : f32 to vector<8x64xf32>
    %24 = arith.maximumf %22, %23 : vector<8x64xf32>
    %25 = arith.truncf %24 : vector<8x64xf32> to vector<8x64xbf16>
    %c0_20 = arith.constant 0 : index
    %c0_21 = arith.constant 0 : index
    %26 = vector.load %arg8[%c0_20, %c0_21] : memref<64x10xbf16, #tpu.memory_space<vmem>>, vector<64x10xbf16>
    %cst_22 = arith.constant dense<0.000000e+00> : vector<8x10xf32>
    %27 = tpu.matmul %25, %26, %cst_22 {dimension_numbers = #tpu.dot_dimension_numbers<[1], [0], [0], [1], [0, 0, 1, 1], [], []>} : vector<8x64xbf16>, vector<64x10xbf16>, vector<8x10xf32> -> vector<8x10xf32>
    %28 = vector.broadcast %3 : vector<1x10xf32> to vector<8x10xf32>
    %29 = arith.addf %27, %28 : vector<8x10xf32>
    %cst_23 = arith.constant dense<0xFF800000> : vector<8xf32>
    %30 = vector.multi_reduction <maximumf>, %29, %cst_23 [1] : vector<8x10xf32> to vector<8xf32>
    %31 = vector.shape_cast %30 : vector<8xf32> to vector<8x1xf32>
    %32 = vector.broadcast %31 : vector<8x1xf32> to vector<8x10xf32>
    %33 = arith.subf %29, %32 : vector<8x10xf32>
    %34 = math.exp %33 : vector<8x10xf32>
    %cst_24 = arith.constant dense<0.000000e+00> : vector<8xf32>
    %35 = vector.multi_reduction <add>, %34, %cst_24 [1] : vector<8x10xf32> to vector<8xf32>
    %36 = vector.shape_cast %35 : vector<8xf32> to vector<8x1xf32>
    %37 = math.log %36 : vector<8x1xf32>
    %38 = vector.broadcast %37 : vector<8x1xf32> to vector<8x10xf32>
    %39 = arith.subf %33, %38 : vector<8x10xf32>
    %c0_25 = arith.constant 0 : index
    %c0_26 = arith.constant 0 : index
    %40 = vector.load %arg10[%c0_25, %c0_26] : memref<8x10xf32, #tpu.memory_space<vmem>>, vector<8x10xf32>
    tpu.vector_store %arg10[%c0_25, %c0_26], %39 {strides = array<i32>} : memref<8x10xf32, #tpu.memory_space<vmem>>, vector<8x10xf32>,
    return
  }
  func.func @transform_0(%arg0: i32) -> (i32, i32) {
    %c0_i32 = arith.constant 0 : i32
    %c0_i32_0 = arith.constant 0 : i32
    return %arg0, %c0_i32 : i32, i32
  }
  func.func @transform_1(%arg0: i32) -> (i32, i32) {
    %c0_i32 = arith.constant 0 : i32
    %c0_i32_0 = arith.constant 0 : i32
    %c0_i32_1 = arith.constant 0 : i32
    return %c0_i32, %c0_i32_0 : i32, i32
  }
  func.func @transform_2(%arg0: i32) -> (i32, i32) {
    %c0_i32 = arith.constant 0 : i32
    %c0_i32_0 = arith.constant 0 : i32
    %c0_i32_1 = arith.constant 0 : i32
    return %c0_i32, %c0_i32_0 : i32, i32
  }
  func.func @transform_3(%arg0: i32) -> (i32, i32) {
    %c0_i32 = arith.constant 0 : i32
    %c0_i32_0 = arith.constant 0 : i32
    %c0_i32_1 = arith.constant 0 : i32
    return %c0_i32, %c0_i32_0 : i32, i32
  }
  func.func @transform_4(%arg0: i32) -> (i32, i32) {
    %c0_i32 = arith.constant 0 : i32
    %c0_i32_0 = arith.constant 0 : i32
    %c0_i32_1 = arith.constant 0 : i32
    return %c0_i32, %c0_i32_0 : i32, i32
  }
  func.func @transform_5(%arg0: i32) -> (i32, i32) {
    %c0_i32 = arith.constant 0 : i32
    %c0_i32_0 = arith.constant 0 : i32
    %c0_i32_1 = arith.constant 0 : i32
    return %c0_i32, %c0_i32_0 : i32, i32
  }
  func.func @transform_6(%arg0: i32) -> (i32, i32) {
    %c0_i32 = arith.constant 0 : i32
    %c0_i32_0 = arith.constant 0 : i32
    %c0_i32_1 = arith.constant 0 : i32
    return %c0_i32, %c0_i32_0 : i32, i32
  }
  func.func @transform_7(%arg0: i32) -> (i32, i32) {
    %c0_i32 = arith.constant 0 : i32
    %c0_i32_0 = arith.constant 0 : i32
    %c0_i32_1 = arith.constant 0 : i32
    return %c0_i32, %c0_i32_0 : i32, i32
  }
  func.func @transform_8(%arg0: i32) -> (i32, i32) {
    %c0_i32 = arith.constant 0 : i32
    %c0_i32_0 = arith.constant 0 : i32
    %c0_i32_1 = arith.constant 0 : i32
    return %c0_i32, %c0_i32_0 : i32, i32
  }
  func.func @transform_9(%arg0: i32) -> (i32, i32) {
    %c0_i32 = arith.constant 0 : i32
    %c0_i32_0 = arith.constant 0 : i32
    return %arg0, %c0_i32 : i32, i32
  }
}

</mosaic_0001>

<llo_original>
// kernel: tpu_custom_call.1
$region0: #{tpu_custom_call.1}
  #allocation0 [shape = 'u32[]', space=smem, size = 0x4, offset = 0x4, fixed_abs, tag = 'smem constant byte address 0x4 - core index']
  #allocation1 [shape = 'u32[144,128]{1,0:T(1,128)}', space=vmem, size = 0x12000, scoped, tag = 'internal scratch']
  %s0 = inlined_call_operand.vmem [shape: bf16[8,784], index: 0, kind: input, shape index: {}]
  %s1 = inlined_call_operand.vmem [shape: bf16[784,64], index: 1, kind: input, shape index: {}]
  %s2 = inlined_call_operand.vmem [shape: f32[1,64], index: 2, kind: input, shape index: {}]
  %s3 = inlined_call_operand.vmem [shape: bf16[64,64], index: 3, kind: input, shape index: {}]
  %s4 = inlined_call_operand.vmem [shape: f32[1,64], index: 4, kind: input, shape index: {}]
  %s5 = inlined_call_operand.vmem [shape: bf16[64,64], index: 5, kind: input, shape index: {}]
  %s6 = inlined_call_operand.vmem [shape: f32[1,64], index: 6, kind: input, shape index: {}]
  %s7 = inlined_call_operand.vmem [shape: bf16[64,10], index: 7, kind: input, shape index: {}]
  %s8 = inlined_call_operand.vmem [shape: f32[1,10], index: 8, kind: input, shape index: {}]
  %s9 = inlined_call_operand.hbm [shape: f32[8,10], index: 9, kind: output, shape index: {}]
  %s10 = sld [smem:[#allocation0]]
  $region46: #{tpu_custom_call.1} parent=0
    _
  %s12 = ssub.s32 1, %s10
  %s13 = scalar_select 0, %s12, %s10
  $region1: #{tpu_custom_call.1} parent=0
    #allocation2 [shape = 'u8[4096]{0}', space=vmem, size = 0x1000, scoped, tag = 'output window, operand 0, single buffered']
    #allocation3 [shape = 's32[1]{0}', space=sflag, size = 0x4, scoped, tag = 'scoped memory for tpu_custom_call.1']
    %14 = vsyncpa [#allocation3], 0
    // Predicated region
    $region2: #{tpu_custom_call.1} parent=1 // pred_check
      _
    $region3: #{tpu_custom_call.1} parent=1 // pred_check_branch
      %16 = sbr.rel (0) target = $region5
    $region4: #{tpu_custom_call.1} parent=1 // pred_region
      _
    $region5: #{tpu_custom_call.1} parent=1 // pred_fallthru
      _
    // Predicated region
    $region6: #{tpu_custom_call.1} parent=1 // pred_check
      _
    $region7: #{tpu_custom_call.1} parent=1 // pred_check_branch
      %18 = sbr.rel (0) target = $region9
    $region8: #{tpu_custom_call.1} parent=1 // pred_region
      _
    $region9: #{tpu_custom_call.1} parent=1 // pred_fallthru
      _
    // Predicated region
    $region10: #{tpu_custom_call.1} parent=1 // pred_check
      _
    $region11: #{tpu_custom_call.1} parent=1 // pred_check_branch
      %20 = sbr.rel (0) target = $region13
    $region12: #{tpu_custom_call.1} parent=1 // pred_region
      _
    $region13: #{tpu_custom_call.1} parent=1 // pred_fallthru
      _
    // Predicated region
    $region14: #{tpu_custom_call.1} parent=1 // pred_check
      _
    $region15: #{tpu_custom_call.1} parent=1 // pred_check_branch
      %22 = sbr.rel (0) target = $region17
    $region16: #{tpu_custom_call.1} parent=1 // pred_region
      _
    $region17: #{tpu_custom_call.1} parent=1 // pred_fallthru
      _
    // Predicated region
    $region18: #{tpu_custom_call.1} parent=1 // pred_check
      _
    $region19: #{tpu_custom_call.1} parent=1 // pred_check_branch
      %24 = sbr.rel (0) target = $region21
    $region20: #{tpu_custom_call.1} parent=1 // pred_region
      _
    $region21: #{tpu_custom_call.1} parent=1 // pred_fallthru
      _
    // Predicated region
    $region22: #{tpu_custom_call.1} parent=1 // pred_check
      _
    $region23: #{tpu_custom_call.1} parent=1 // pred_check_branch
      %26 = sbr.rel (0) target = $region25
    $region24: #{tpu_custom_call.1} parent=1 // pred_region
      _
    $region25: #{tpu_custom_call.1} parent=1 // pred_fallthru
      _
    // Predicated region
    $region26: #{tpu_custom_call.1} parent=1 // pred_check
      _
    $region27: #{tpu_custom_call.1} parent=1 // pred_check_branch
      %28 = sbr.rel (0) target = $region29
    $region28: #{tpu_custom_call.1} parent=1 // pred_region
      _
    $region29: #{tpu_custom_call.1} parent=1 // pred_fallthru
      _
    // Predicated region
    $region30: #{tpu_custom_call.1} parent=1 // pred_check
      _
    $region31: #{tpu_custom_call.1} parent=1 // pred_check_branch
      %30 = sbr.rel (0) target = $region33
    $region32: #{tpu_custom_call.1} parent=1 // pred_region
      _
    $region33: #{tpu_custom_call.1} parent=1 // pred_fallthru
      _
    // Predicated region
    $region34: #{tpu_custom_call.1} parent=1 // pred_check
      _
    $region35: #{tpu_custom_call.1} parent=1 // pred_check_branch
      %32 = sbr.rel (0) target = $region37
    $region36: #{tpu_custom_call.1} parent=1 // pred_region
      _
    $region37: #{tpu_custom_call.1} parent=1 // pred_fallthru
      _
    %v34 = vld [vmem:[%s2] sm:$0x1]
    %v35 = vld [vmem:[%s4] sm:$0x1]
    %v36 = vld [vmem:[%s6] sm:$0x1]
    %v37 = vld [vmem:[%s8] sm:$0x1]
    %v38 = vld [vmem:[%s0] sm:$0xff]
    %v39 = vld [vmem:[%s0 + $0x8] sm:$0xff]
    %v40 = vld [vmem:[%s0 + $0x10] sm:$0xff]
    %v41 = vld [vmem:[%s0 + $0x18] sm:$0xf]
    %v42 = vld [vmem:[%s1] sm:$0xf]
    %v43 = vld [vmem:[%s1 + $0x4] sm:$0xf]
    %v44 = vld [vmem:[%s1 + $0x8] sm:$0xf]
    %v45 = vld [vmem:[%s1 + $0xc] sm:$0xf]
    %v46 = vld [vmem:[%s1 + $0x10] sm:$0xf]
    %v47 = vld [vmem:[%s1 + $0x14] sm:$0xf]
    %v48 = vld [vmem:[%s1 + $0x18] sm:$0xf]
    %v49 = vld [vmem:[%s1 + $0x1c] sm:$0xf]
    %v50 = vld [vmem:[%s1 + $0x20] sm:$0xf]
    %v51 = vld [vmem:[%s1 + $0x24] sm:$0xf]
    %v52 = vld [vmem:[%s1 + $0x28] sm:$0xf]
    %v53 = vld [vmem:[%s1 + $0x2c] sm:$0xf]
    %v54 = vld [vmem:[%s1 + $0x30] sm:$0xf]
    %v55 = vld [vmem:[%s1 + $0x34] sm:$0xf]
    %v56 = vld [vmem:[%s1 + $0x38] sm:$0xf]
    %v57 = vld [vmem:[%s1 + $0x3c] sm:$0xf]
    %v58 = vld [vmem:[%s1 + $0x40] sm:$0xf]
    %v59 = vld [vmem:[%s1 + $0x44] sm:$0xf]
    %v60 = vld [vmem:[%s1 + $0x48] sm:$0xf]
    %v61 = vld [vmem:[%s1 + $0x4c] sm:$0xf]
    %v62 = vld [vmem:[%s1 + $0x50] sm:$0xf]
    %v63 = vld [vmem:[%s1 + $0x54] sm:$0xf]
    %v64 = vld [vmem:[%s1 + $0x58] sm:$0xf]
    %v65 = vld [vmem:[%s1 + $0x5c] sm:$0xf]
    %v66 = vld [vmem:[%s1 + $0x60] sm:$0xf]
    %v67 = vld [vmem:[%s1 + $0x64] sm:$0xf]
    %v68 = vld [vmem:[%s1 + $0x68] sm:$0xf]
    %v69 = vld [vmem:[%s1 + $0x6c] sm:$0xf]
    %v70 = vld [vmem:[%s1 + $0x70] sm:$0xf]
    %v71 = vld [vmem:[%s1 + $0x74] sm:$0xf]
    %v72 = vld [vmem:[%s1 + $0x78] sm:$0xf]
    %v73 = vld [vmem:[%s1 + $0x7c] sm:$0xf]
    %v74 = vld [vmem:[%s1 + $0x80] sm:$0xf]
    %v75 = vld [vmem:[%s1 + $0x84] sm:$0xf]
    %v76 = vld [vmem:[%s1 + $0x88] sm:$0xf]
    %v77 = vld [vmem:[%s1 + $0x8c] sm:$0xf]
    %v78 = vld [vmem:[%s1 + $0x90] sm:$0xf]
    %v79 = vld [vmem:[%s1 + $0x94] sm:$0xf]
    %v80 = vld [vmem:[%s1 + $0x98] sm:$0xf]
    %v81 = vld [vmem:[%s1 + $0x9c] sm:$0xf]
    %v82 = vld [vmem:[%s1 + $0xa0] sm:$0xf]
    %v83 = vld [vmem:[%s1 + $0xa4] sm:$0xf]
    %v84 = vld [vmem:[%s1 + $0xa8] sm:$0xf]
    %v85 = vld [vmem:[%s1 + $0xac] sm:$0xf]
    %v86 = vld [vmem:[%s1 + $0xb0] sm:$0xf]
    %v87 = vld [vmem:[%s1 + $0xb4] sm:$0xf]
    %v88 = vld [vmem:[%s1 + $0xb8] sm:$0xf]
    %v89 = vld [vmem:[%s1 + $0xbc] sm:$0xf]
    %v90 = vld [vmem:[%s1 + $0xc0] sm:$0xf]
    %v91 = vld [vmem:[%s1 + $0xc4] sm:$0xf]
    %v92 = vld [vmem:[%s1 + $0xc8] sm:$0xf]
    %v93 = vld [vmem:[%s1 + $0xcc] sm:$0xf]
    %v94 = vld [vmem:[%s1 + $0xd0] sm:$0xf]
    %v95 = vld [vmem:[%s1 + $0xd4] sm:$0xf]
    %v96 = vld [vmem:[%s1 + $0xd8] sm:$0xf]
    %v97 = vld [vmem:[%s1 + $0xdc] sm:$0xf]
    %v98 = vld [vmem:[%s1 + $0xe0] sm:$0xf]
    %v99 = vld [vmem:[%s1 + $0xe4] sm:$0xf]
    %v100 = vld [vmem:[%s1 + $0xe8] sm:$0xf]
    %v101 = vld [vmem:[%s1 + $0xec] sm:$0xf]
    %v102 = vld [vmem:[%s1 + $0xf0] sm:$0xf]
    %v103 = vld [vmem:[%s1 + $0xf4] sm:$0xf]
    %v104 = vld [vmem:[%s1 + $0xf8] sm:$0xf]
    %v105 = vld [vmem:[%s1 + $0xfc] sm:$0xf]
    %v106 = vld [vmem:[%s1 + $0x100] sm:$0xf]
    %v107 = vld [vmem:[%s1 + $0x104] sm:$0xf]
    %v108 = vld [vmem:[%s1 + $0x108] sm:$0xf]
    %v109 = vld [vmem:[%s1 + $0x10c] sm:$0xf]
    %v110 = vld [vmem:[%s1 + $0x110] sm:$0xf]
    %v111 = vld [vmem:[%s1 + $0x114] sm:$0xf]
    %v112 = vld [vmem:[%s1 + $0x118] sm:$0xf]
    %v113 = vld [vmem:[%s1 + $0x11c] sm:$0xf]
    %v114 = vld [vmem:[%s1 + $0x120] sm:$0xf]
    %v115 = vld [vmem:[%s1 + $0x124] sm:$0xf]
    %v116 = vld [vmem:[%s1 + $0x128] sm:$0xf]
    %v117 = vld [vmem:[%s1 + $0x12c] sm:$0xf]
    %v118 = vld [vmem:[%s1 + $0x130] sm:$0xf]
    %v119 = vld [vmem:[%s1 + $0x134] sm:$0xf]
    %v120 = vld [vmem:[%s1 + $0x138] sm:$0xf]
    %v121 = vld [vmem:[%s1 + $0x13c] sm:$0xf]
    %v122 = vld [vmem:[%s1 + $0x140] sm:$0xf]
    %v123 = vld [vmem:[%s1 + $0x144] sm:$0xf]
    %v124 = vld [vmem:[%s1 + $0x148] sm:$0xf]
    %v125 = vld [vmem:[%s1 + $0x14c] sm:$0xf]
    %v126 = vld [vmem:[%s1 + $0x150] sm:$0xf]
    %v127 = vld [vmem:[%s1 + $0x154] sm:$0xf]
    %v128 = vld [vmem:[%s1 + $0x158] sm:$0xf]
    %v129 = vld [vmem:[%s1 + $0x15c] sm:$0xf]
    %v130 = vld [vmem:[%s1 + $0x160] sm:$0xf]
    %v131 = vld [vmem:[%s1 + $0x164] sm:$0xf]
    %v132 = vld [vmem:[%s1 + $0x168] sm:$0xf]
    %v133 = vld [vmem:[%s1 + $0x16c] sm:$0xf]
    %v134 = vld [vmem:[%s1 + $0x170] sm:$0xf]
    %v135 = vld [vmem:[%s1 + $0x174] sm:$0xf]
    %v136 = vld [vmem:[%s1 + $0x178] sm:$0xf]
    %v137 = vld [vmem:[%s1 + $0x17c] sm:$0xf]
    %v138 = vld [vmem:[%s1 + $0x180] sm:$0xf]
    %v139 = vld [vmem:[%s1 + $0x184] sm:$0xf]
    %v141 = vlaneseq
    %v142 = vshrl.u32 %v141, 7
    %v143 = vsub.s32 0, %v142
    %v144 = vrot.slane %v34, %v143
    %v150 = vunpack.c.l.b16 %v38
    %v151 = vunpack.c.h.b16 %v38
    %v152 = vunpack.c.l.b16 %v39
    %v153 = vunpack.c.h.b16 %v39
    %v154 = vunpack.c.l.b16 %v40
    %v155 = vunpack.c.h.b16 %v40
    %v156 = vunpack.c.l.b16 %v41
    %v157 = vpack.c.b16 %v150, %v150
    %v158 = vpack.c.b16 %v151, %v151
    %v159 = vpack.c.b16 %v152, %v152
    %v160 = vpack.c.b16 %v153, %v153
    %v161 = vpack.c.b16 %v154, %v154
    %v162 = vpack.c.b16 %v155, %v155
    %v163 = vpack.c.b16 %v156, %v156
    %v268 = vunpack.c.l.b16 %v42
    %v269 = vunpack.c.l.b16 %v43
    %v270 = vunpack.c.l.b16 %v44
    %v271 = vunpack.c.l.b16 %v45
    %v272 = vunpack.c.l.b16 %v46
    %v273 = vunpack.c.l.b16 %v47
    %v274 = vunpack.c.l.b16 %v48
    %v275 = vunpack.c.l.b16 %v49
    %v276 = vunpack.c.l.b16 %v50
    %v277 = vunpack.c.l.b16 %v51
    %v278 = vunpack.c.l.b16 %v52
    %v279 = vunpack.c.l.b16 %v53
    %v280 = vunpack.c.l.b16 %v54
    %v281 = vunpack.c.l.b16 %v55
    %v282 = vunpack.c.l.b16 %v56
    %v283 = vunpack.c.l.b16 %v57
    %v284 = vunpack.c.l.b16 %v58
    %v285 = vunpack.c.l.b16 %v59
    %v286 = vunpack.c.l.b16 %v60
    %v287 = vunpack.c.l.b16 %v61
    %v288 = vunpack.c.l.b16 %v62
    %v289 = vunpack.c.l.b16 %v63
    %v290 = vunpack.c.l.b16 %v64
    %v291 = vunpack.c.l.b16 %v65
    %v292 = vunpack.c.l.b16 %v66
    %v293 = vunpack.c.l.b16 %v67
    %v294 = vunpack.c.l.b16 %v68
    %v295 = vunpack.c.l.b16 %v69
    %v296 = vunpack.c.l.b16 %v70
    %v297 = vunpack.c.l.b16 %v71
    %v298 = vunpack.c.l.b16 %v72
    %v299 = vunpack.c.l.b16 %v73
    %v300 = vunpack.c.l.b16 %v74
    %v301 = vunpack.c.l.b16 %v75
    %v302 = vunpack.c.l.b16 %v76
    %v303 = vunpack.c.l.b16 %v77
    %v304 = vunpack.c.l.b16 %v78
    %v305 = vunpack.c.l.b16 %v79
    %v306 = vunpack.c.l.b16 %v80
    %v307 = vunpack.c.l.b16 %v81
    %v308 = vunpack.c.l.b16 %v82
    %v309 = vunpack.c.l.b16 %v83
    %v310 = vunpack.c.l.b16 %v84
    %v311 = vunpack.c.l.b16 %v85
    %v312 = vunpack.c.l.b16 %v86
    %v313 = vunpack.c.l.b16 %v87
    %v314 = vunpack.c.l.b16 %v88
    %v315 = vunpack.c.l.b16 %v89
    %v316 = vunpack.c.l.b16 %v90
    %v317 = vunpack.c.l.b16 %v91
    %v318 = vunpack.c.l.b16 %v92
    %v319 = vunpack.c.l.b16 %v93
    %v320 = vunpack.c.l.b16 %v94
    %v321 = vunpack.c.l.b16 %v95
    %v322 = vunpack.c.l.b16 %v96
    %v323 = vunpack.c.l.b16 %v97
    %v324 = vunpack.c.l.b16 %v98
    %v325 = vunpack.c.l.b16 %v99
    %v326 = vunpack.c.l.b16 %v100
    %v327 = vunpack.c.l.b16 %v101
    %v328 = vunpack.c.l.b16 %v102
    %v329 = vunpack.c.l.b16 %v103
    %v330 = vunpack.c.l.b16 %v104
    %v331 = vunpack.c.l.b16 %v105
    %v332 = vunpack.c.l.b16 %v106
    %v333 = vunpack.c.l.b16 %v107
    %v334 = vunpack.c.l.b16 %v108
    %v335 = vunpack.c.l.b16 %v109
    %v336 = vunpack.c.l.b16 %v110
    %v337 = vunpack.c.l.b16 %v111
    %v338 = vunpack.c.l.b16 %v112
    %v339 = vunpack.c.l.b16 %v113
    %v340 = vunpack.c.l.b16 %v114
    %v341 = vunpack.c.l.b16 %v115
    %v342 = vunpack.c.l.b16 %v116
    %v343 = vunpack.c.l.b16 %v117
    %v344 = vunpack.c.l.b16 %v118
    %v345 = vunpack.c.l.b16 %v119
    %v346 = vunpack.c.l.b16 %v120
    %v347 = vunpack.c.l.b16 %v121
    %v348 = vunpack.c.l.b16 %v122
    %v349 = vunpack.c.l.b16 %v123
    %v350 = vunpack.c.l.b16 %v124
    %v351 = vunpack.c.l.b16 %v125
    %v352 = vunpack.c.l.b16 %v126
    %v353 = vunpack.c.l.b16 %v127
    %v354 = vunpack.c.l.b16 %v128
    %v355 = vunpack.c.l.b16 %v129
    %v356 = vunpack.c.l.b16 %v130
    %v357 = vunpack.c.l.b16 %v131
    %v358 = vunpack.c.l.b16 %v132
    %v359 = vunpack.c.l.b16 %v133
    %v360 = vunpack.c.l.b16 %v134
    %v361 = vunpack.c.l.b16 %v135
    %v362 = vunpack.c.l.b16 %v136
    %v363 = vunpack.c.l.b16 %v137
    %v364 = vunpack.c.l.b16 %v138
    %v365 = vunpack.c.l.b16 %v139
    %v366 = vpack.c.b16 %v269, %v268
    %v367 = vpack.c.b16 %v271, %v270
    %v368 = vpack.c.b16 %v273, %v272
    %v369 = vpack.c.b16 %v275, %v274
    %v370 = vpack.c.b16 %v277, %v276
    %v371 = vpack.c.b16 %v279, %v278
    %v372 = vpack.c.b16 %v281, %v280
    %v373 = vpack.c.b16 %v283, %v282
    %v374 = vpack.c.b16 %v285, %v284
    %v375 = vpack.c.b16 %v287, %v286
    %v376 = vpack.c.b16 %v289, %v288
    %v377 = vpack.c.b16 %v291, %v290
    %v378 = vpack.c.b16 %v293, %v292
    %v379 = vpack.c.b16 %v295, %v294
    %v380 = vpack.c.b16 %v297, %v296
    %v381 = vpack.c.b16 %v299, %v298
    %v382 = vpack.c.b16 %v301, %v300
    %v383 = vpack.c.b16 %v303, %v302
    %v384 = vpack.c.b16 %v305, %v304
    %v385 = vpack.c.b16 %v307, %v306
    %v386 = vpack.c.b16 %v309, %v308
    %v387 = vpack.c.b16 %v311, %v310
    %v388 = vpack.c.b16 %v313, %v312
    %v389 = vpack.c.b16 %v315, %v314
    %v390 = vpack.c.b16 %v317, %v316
    %v391 = vpack.c.b16 %v319, %v318
    %v392 = vpack.c.b16 %v321, %v320
    %v393 = vpack.c.b16 %v323, %v322
    %v394 = vpack.c.b16 %v325, %v324
    %v395 = vpack.c.b16 %v327, %v326
    %v396 = vpack.c.b16 %v329, %v328
    %v397 = vpack.c.b16 %v331, %v330
    %v398 = vpack.c.b16 %v333, %v332
    %v399 = vpack.c.b16 %v335, %v334
    %v400 = vpack.c.b16 %v337, %v336
    %v401 = vpack.c.b16 %v339, %v338
    %v402 = vpack.c.b16 %v341, %v340
    %v403 = vpack.c.b16 %v343, %v342
    %v404 = vpack.c.b16 %v345, %v344
    %v405 = vpack.c.b16 %v347, %v346
    %v406 = vpack.c.b16 %v349, %v348
    %v407 = vpack.c.b16 %v351, %v350
    %v408 = vpack.c.b16 %v353, %v352
    %v409 = vpack.c.b16 %v355, %v354
    %v410 = vpack.c.b16 %v357, %v356
    %v411 = vpack.c.b16 %v359, %v358
    %v412 = vpack.c.b16 %v361, %v360
    %v413 = vpack.c.b16 %v363, %v362
    %v414 = vpack.c.b16 %v365, %v364
    %vm464 = vcmask 130048
    %v466 = vsel %vm464, %v163, 0
    %468 = vmatprep.subr.bf16.mxu0 0
    %469 = vmatpush1.bf16.msra.mxu0 %v366
    %470 = vmatprep.subr.bf16.mxu0 0
    %471 = vmatpush1.bf16.msra.mxu0 %v367
    %472 = vmatprep.subr.bf16.mxu0 0
    %473 = vmatpush1.bf16.msra.mxu0 %v368
    %474 = vmatprep.subr.bf16.mxu0 0
    %475 = vmatpush1.bf16.msra.mxu0 %v369
    %476 = vmatprep.subr.bf16.mxu0 0
    %477 = vmatpush1.bf16.msra.mxu0 %v370
    %478 = vmatprep.subr.bf16.mxu0 0
    %479 = vmatpush1.bf16.msra.mxu0 %v371
    %480 = vmatprep.subr.bf16.mxu0 0
    %481 = vmatpush1.bf16.msra.mxu0 %v372
    %482 = vmatprep.subr.bf16.mxu0 0
    %483 = vmatpush1.bf16.msra.mxu0 %v373
    %484 = vmatprep.subr.bf16.mxu0 0
    %485 = vmatpush1.bf16.msra.mxu0 %v374
    %486 = vmatprep.subr.bf16.mxu0 0
    %487 = vmatpush1.bf16.msra.mxu0 %v375
    %488 = vmatprep.subr.bf16.mxu0 0
    %489 = vmatpush1.bf16.msra.mxu0 %v376
    %490 = vmatprep.subr.bf16.mxu0 0
    %491 = vmatpush1.bf16.msra.mxu0 %v377
    %492 = vmatprep.subr.bf16.mxu0 0
    %493 = vmatpush1.bf16.msra.mxu0 %v378
    %494 = vmatprep.subr.bf16.mxu0 0
    %495 = vmatpush1.bf16.msra.mxu0 %v379
    %496 = vmatprep.subr.bf16.mxu0 0
    %497 = vmatpush1.bf16.msra.mxu0 %v380
    %498 = vmatprep.subr.bf16.mxu0 0
    %499 = vmatpush1.bf16.msra.mxu0 %v381
    %500 = vmatprep.mubr.bf16.mxu0 %v158
    %501 = vmatmul.mubr.bf16.gmra.mrb[0].mxu0 %v157
    %v502 = vpop.f32.mrb[0].mxu0
    %v503 = vadd.f32 %v144, %v502
    %v504 = vpop.f32.mrb[0].mxu0
    %v505 = vpop.f32.mrb[0].mxu0
    %v506 = vpop.f32.mrb[0].mxu0
    %507 = vdwg.mxu0
    %508 = vmatprep.subr.bf16.mxu0 0
    %509 = vmatpush1.bf16.msra.mxu0 %v382
    %510 = vmatprep.subr.bf16.mxu0 0
    %511 = vmatpush1.bf16.msra.mxu0 %v383
    %512 = vmatprep.subr.bf16.mxu0 0
    %513 = vmatpush1.bf16.msra.mxu0 %v384
    %514 = vmatprep.subr.bf16.mxu0 0
    %515 = vmatpush1.bf16.msra.mxu0 %v385
    %516 = vmatprep.subr.bf16.mxu0 0
    %517 = vmatpush1.bf16.msra.mxu0 %v386
    %518 = vmatprep.subr.bf16.mxu0 0
    %519 = vmatpush1.bf16.msra.mxu0 %v387
    %520 = vmatprep.subr.bf16.mxu0 0
    %521 = vmatpush1.bf16.msra.mxu0 %v388
    %522 = vmatprep.subr.bf16.mxu0 0
    %523 = vmatpush1.bf16.msra.mxu0 %v389
    %524 = vmatprep.subr.bf16.mxu0 0
    %525 = vmatpush1.bf16.msra.mxu0 %v390
    %526 = vmatprep.subr.bf16.mxu0 0
    %527 = vmatpush1.bf16.msra.mxu0 %v391
    %528 = vmatprep.subr.bf16.mxu0 0
    %529 = vmatpush1.bf16.msra.mxu0 %v392
    %530 = vmatprep.subr.bf16.mxu0 0
    %531 = vmatpush1.bf16.msra.mxu0 %v393
    %532 = vmatprep.subr.bf16.mxu0 0
    %533 = vmatpush1.bf16.msra.mxu0 %v394
    %534 = vmatprep.subr.bf16.mxu0 0
    %535 = vmatpush1.bf16.msra.mxu0 %v395
    %536 = vmatprep.subr.bf16.mxu0 0
    %537 = vmatpush1.bf16.msra.mxu0 %v396
    %538 = vmatprep.subr.bf16.mxu0 0
    %539 = vmatpush1.bf16.msra.mxu0 %v397
    %540 = vmatprep.mubr.bf16.mxu0 %v160
    %541 = vmatmul.mubr.bf16.gmra.mrb[0].mxu0 %v159
    %v542 = vpop.f32.mrb[0].mxu0
    %v543 = vadd.f32 %v503, %v542
    %v544 = vpop.f32.mrb[0].mxu0
    %v545 = vpop.f32.mrb[0].mxu0
    %v546 = vpop.f32.mrb[0].mxu0
    %547 = vdwg.mxu0
    %548 = vmatprep.subr.bf16.mxu0 0
    %549 = vmatpush1.bf16.msra.mxu0 %v398
    %550 = vmatprep.subr.bf16.mxu0 0
    %551 = vmatpush1.bf16.msra.mxu0 %v399
    %552 = vmatprep.subr.bf16.mxu0 0
    %553 = vmatpush1.bf16.msra.mxu0 %v400
    %554 = vmatprep.subr.bf16.mxu0 0
    %555 = vmatpush1.bf16.msra.mxu0 %v401
    %556 = vmatprep.subr.bf16.mxu0 0
    %557 = vmatpush1.bf16.msra.mxu0 %v402
    %558 = vmatprep.subr.bf16.mxu0 0
    %559 = vmatpush1.bf16.msra.mxu0 %v403
    %560 = vmatprep.subr.bf16.mxu0 0
    %561 = vmatpush1.bf16.msra.mxu0 %v404
    %562 = vmatprep.subr.bf16.mxu0 0
    %563 = vmatpush1.bf16.msra.mxu0 %v405
    %564 = vmatprep.subr.bf16.mxu0 0
    %565 = vmatpush1.bf16.msra.mxu0 %v406
    %566 = vmatprep.subr.bf16.mxu0 0
    %567 = vmatpush1.bf16.msra.mxu0 %v407
    %568 = vmatprep.subr.bf16.mxu0 0
    %569 = vmatpush1.bf16.msra.mxu0 %v408
    %570 = vmatprep.subr.bf16.mxu0 0
    %571 = vmatpush1.bf16.msra.mxu0 %v409
    %572 = vmatprep.subr.bf16.mxu0 0
    %573 = vmatpush1.bf16.msra.mxu0 %v410
    %574 = vmatprep.subr.bf16.mxu0 0
    %575 = vmatpush1.bf16.msra.mxu0 %v411
    %576 = vmatprep.subr.bf16.mxu0 0
    %577 = vmatpush1.bf16.msra.mxu0 %v412
    %578 = vmatprep.subr.bf16.mxu0 0
    %579 = vmatpush1.bf16.msra.mxu0 %v413
    %580 = vmatprep.mubr.bf16.mxu0 %v162
    %581 = vmatmul.mubr.bf16.gmra.mrb[0].mxu0 %v161
    %v582 = vpop.f32.mrb[0].mxu0
    %v583 = vadd.f32 %v543, %v582
    %v584 = vpop.f32.mrb[0].mxu0
    %v585 = vpop.f32.mrb[0].mxu0
    %v586 = vpop.f32.mrb[0].mxu0
    %587 = vdwg.mxu0
    %588 = vmatprep.subr.bf16.mxu0 0
    %589 = vmatpush1.bf16.msra.mxu0 %v414
    %590 = vmatprep.subr.bf16.mxu0 0
    %591 = vmatpush1.bf16.msra.mxu0 0
    %592 = vmatprep.subr.bf16.mxu0 0
    %593 = vmatpush1.bf16.msra.mxu0 0
    %594 = vmatprep.subr.bf16.mxu0 0
    %595 = vmatpush1.bf16.msra.mxu0 0
    %596 = vmatprep.subr.bf16.mxu0 0
    %597 = vmatpush1.bf16.msra.mxu0 0
    %598 = vmatprep.subr.bf16.mxu0 0
    %599 = vmatpush1.bf16.msra.mxu0 0
    %600 = vmatprep.subr.bf16.mxu0 0
    %601 = vmatpush1.bf16.msra.mxu0 0
    %602 = vmatprep.subr.bf16.mxu0 0
    %603 = vmatpush1.bf16.msra.mxu0 0
    %604 = vmatprep.subr.bf16.mxu0 0
    %605 = vmatpush1.bf16.msra.mxu0 0
    %606 = vmatprep.subr.bf16.mxu0 0
    %607 = vmatpush1.bf16.msra.mxu0 0
    %608 = vmatprep.subr.bf16.mxu0 0
    %609 = vmatpush1.bf16.msra.mxu0 0
    %610 = vmatprep.subr.bf16.mxu0 0
    %611 = vmatpush1.bf16.msra.mxu0 0
    %612 = vmatprep.subr.bf16.mxu0 0
    %613 = vmatpush1.bf16.msra.mxu0 0
    %614 = vmatprep.subr.bf16.mxu0 0
    %615 = vmatpush1.bf16.msra.mxu0 0
    %616 = vmatprep.subr.bf16.mxu0 0
    %617 = vmatpush1.bf16.msra.mxu0 0
    %618 = vmatprep.subr.bf16.mxu0 0
    %619 = vmatpush1.bf16.msra.mxu0 0
    %620 = vmatprep.mubr.bf16.mxu0 0
    %621 = vmatmul.mubr.bf16.gmra.mrb[0].mxu0 %v466
    %v622 = vpop.f32.mrb[0].mxu0
    %v623 = vadd.f32 %v583, %v622
    %v624 = vpop.f32.mrb[0].mxu0
    %v625 = vpop.f32.mrb[0].mxu0
    %v626 = vpop.f32.mrb[0].mxu0
    %627 = vdwg.mxu0
    %v628 = vmax.f32 %v623, 0.0
    %v629 = vpack.c.bf16 %v628, %v628
    %v630 = vld [vmem:[%s3] sm:$0xf]
    %v631 = vld [vmem:[%s3 + $0x4] sm:$0xf]
    %v632 = vld [vmem:[%s3 + $0x8] sm:$0xf]
    %v633 = vld [vmem:[%s3 + $0xc] sm:$0xf]
    %v634 = vld [vmem:[%s3 + $0x10] sm:$0xf]
    %v635 = vld [vmem:[%s3 + $0x14] sm:$0xf]
    %v636 = vld [vmem:[%s3 + $0x18] sm:$0xf]
    %v637 = vld [vmem:[%s3 + $0x1c] sm:$0xf]
    %v639 = vlaneseq
    %v640 = vshrl.u32 %v639, 7
    %v641 = vsub.s32 0, %v640
    %v642 = vrot.slane %v35, %v641
    %v652 = vunpack.c.l.b16 %v630
    %v653 = vunpack.c.l.b16 %v631
    %v654 = vunpack.c.l.b16 %v632
    %v655 = vunpack.c.l.b16 %v633
    %v656 = vunpack.c.l.b16 %v634
    %v657 = vunpack.c.l.b16 %v635
    %v658 = vunpack.c.l.b16 %v636
    %v659 = vunpack.c.l.b16 %v637
    %v660 = vpack.c.b16 %v653, %v652
    %v661 = vpack.c.b16 %v655, %v654
    %v662 = vpack.c.b16 %v657, %v656
    %v663 = vpack.c.b16 %v659, %v658
    %vm668 = vcmask 523264
    %v670 = vsel %vm668, %v629, 0
    %672 = vmatprep.subr.bf16.mxu0 0
    %673 = vmatpush1.bf16.msra.mxu0 %v660
    %674 = vmatprep.subr.bf16.mxu0 0
    %675 = vmatpush1.bf16.msra.mxu0 %v661
    %676 = vmatprep.subr.bf16.mxu0 0
    %677 = vmatpush1.bf16.msra.mxu0 %v662
    %678 = vmatprep.subr.bf16.mxu0 0
    %679 = vmatpush1.bf16.msra.mxu0 %v663
    %680 = vmatprep.subr.bf16.mxu0 0
    %681 = vmatpush1.bf16.msra.mxu0 0
    %682 = vmatprep.subr.bf16.mxu0 0
    %683 = vmatpush1.bf16.msra.mxu0 0
    %684 = vmatprep.subr.bf16.mxu0 0
    %685 = vmatpush1.bf16.msra.mxu0 0
    %686 = vmatprep.subr.bf16.mxu0 0
    %687 = vmatpush1.bf16.msra.mxu0 0
    %688 = vmatprep.subr.bf16.mxu0 0
    %689 = vmatpush1.bf16.msra.mxu0 0
    %690 = vmatprep.subr.bf16.mxu0 0
    %691 = vmatpush1.bf16.msra.mxu0 0
    %692 = vmatprep.subr.bf16.mxu0 0
    %693 = vmatpush1.bf16.msra.mxu0 0
    %694 = vmatprep.subr.bf16.mxu0 0
    %695 = vmatpush1.bf16.msra.mxu0 0
    %696 = vmatprep.subr.bf16.mxu0 0
    %697 = vmatpush1.bf16.msra.mxu0 0
    %698 = vmatprep.subr.bf16.mxu0 0
    %699 = vmatpush1.bf16.msra.mxu0 0
    %700 = vmatprep.subr.bf16.mxu0 0
    %701 = vmatpush1.bf16.msra.mxu0 0
    %702 = vmatprep.subr.bf16.mxu0 0
    %703 = vmatpush1.bf16.msra.mxu0 0
    %704 = vmatprep.mubr.bf16.mxu0 0
    %705 = vmatmul.mubr.bf16.gmra.mrb[0].mxu0 %v670
    %v706 = vpop.f32.mrb[0].mxu0
    %v707 = vadd.f32 %v642, %v706
    %v708 = vpop.f32.mrb[0].mxu0
    %v709 = vpop.f32.mrb[0].mxu0
    %v710 = vpop.f32.mrb[0].mxu0
    %711 = vdwg.mxu0
    %v712 = vmax.f32 %v707, 0.0
    %v713 = vpack.c.bf16 %v712, %v712
    %v714 = vld [vmem:[%s5] sm:$0xf]
    %v715 = vld [vmem:[%s5 + $0x4] sm:$0xf]
    %v716 = vld [vmem:[%s5 + $0x8] sm:$0xf]
    %v717 = vld [vmem:[%s5 + $0xc] sm:$0xf]
    %v718 = vld [vmem:[%s5 + $0x10] sm:$0xf]
    %v719 = vld [vmem:[%s5 + $0x14] sm:$0xf]
    %v720 = vld [vmem:[%s5 + $0x18] sm:$0xf]
    %v721 = vld [vmem:[%s5 + $0x1c] sm:$0xf]
    %v723 = vlaneseq
    %v724 = vshrl.u32 %v723, 7
    %v725 = vsub.s32 0, %v724
    %v726 = vrot.slane %v36, %v725
    %v736 = vunpack.c.l.b16 %v714
    %v737 = vunpack.c.l.b16 %v715
    %v738 = vunpack.c.l.b16 %v716
    %v739 = vunpack.c.l.b16 %v717
    %v740 = vunpack.c.l.b16 %v718
    %v741 = vunpack.c.l.b16 %v719
    %v742 = vunpack.c.l.b16 %v720
    %v743 = vunpack.c.l.b16 %v721
    %v744 = vpack.c.b16 %v737, %v736
    %v745 = vpack.c.b16 %v739, %v738
    %v746 = vpack.c.b16 %v741, %v740
    %v747 = vpack.c.b16 %v743, %v742
    %v753 = vsel %vm668, %v713, 0
    %755 = vmatprep.subr.bf16.mxu0 0
    %756 = vmatpush1.bf16.msra.mxu0 %v744
    %757 = vmatprep.subr.bf16.mxu0 0
    %758 = vmatpush1.bf16.msra.mxu0 %v745
    %759 = vmatprep.subr.bf16.mxu0 0
    %760 = vmatpush1.bf16.msra.mxu0 %v746
    %761 = vmatprep.subr.bf16.mxu0 0
    %762 = vmatpush1.bf16.msra.mxu0 %v747
    %763 = vmatprep.subr.bf16.mxu0 0
    %764 = vmatpush1.bf16.msra.mxu0 0
    %765 = vmatprep.subr.bf16.mxu0 0
    %766 = vmatpush1.bf16.msra.mxu0 0
    %767 = vmatprep.subr.bf16.mxu0 0
    %768 = vmatpush1.bf16.msra.mxu0 0
    %769 = vmatprep.subr.bf16.mxu0 0
    %770 = vmatpush1.bf16.msra.mxu0 0
    %771 = vmatprep.subr.bf16.mxu0 0
    %772 = vmatpush1.bf16.msra.mxu0 0
    %773 = vmatprep.subr.bf16.mxu0 0
    %774 = vmatpush1.bf16.msra.mxu0 0
    %775 = vmatprep.subr.bf16.mxu0 0
    %776 = vmatpush1.bf16.msra.mxu0 0
    %777 = vmatprep.subr.bf16.mxu0 0
    %778 = vmatpush1.bf16.msra.mxu0 0
    %779 = vmatprep.subr.bf16.mxu0 0
    %780 = vmatpush1.bf16.msra.mxu0 0
    %781 = vmatprep.subr.bf16.mxu0 0
    %782 = vmatpush1.bf16.msra.mxu0 0
    %783 = vmatprep.subr.bf16.mxu0 0
    %784 = vmatpush1.bf16.msra.mxu0 0
    %785 = vmatprep.subr.bf16.mxu0 0
    %786 = vmatpush1.bf16.msra.mxu0 0
    %787 = vmatprep.mubr.bf16.mxu0 0
    %788 = vmatmul.mubr.bf16.gmra.mrb[0].mxu0 %v753
    %v789 = vpop.f32.mrb[0].mxu0
    %v790 = vadd.f32 %v726, %v789
    %v791 = vpop.f32.mrb[0].mxu0
    %v792 = vpop.f32.mrb[0].mxu0
    %v793 = vpop.f32.mrb[0].mxu0
    %794 = vdwg.mxu0
    %v795 = vmax.f32 %v790, 0.0
    %v796 = vpack.c.bf16 %v795, %v795
    %v797 = vld [vmem:[%s7] sm:$0xf]
    %v798 = vld [vmem:[%s7 + $0x4] sm:$0xf]
    %v799 = vld [vmem:[%s7 + $0x8] sm:$0xf]
    %v800 = vld [vmem:[%s7 + $0xc] sm:$0xf]
    %v801 = vld [vmem:[%s7 + $0x10] sm:$0xf]
    %v802 = vld [vmem:[%s7 + $0x14] sm:$0xf]
    %v803 = vld [vmem:[%s7 + $0x18] sm:$0xf]
    %v804 = vld [vmem:[%s7 + $0x1c] sm:$0xf]
    %v806 = vlaneseq
    %v807 = vshrl.u32 %v806, 7
    %v808 = vsub.s32 0, %v807
    %v809 = vrot.slane %v37, %v808
    %v819 = vunpack.c.l.b16 %v797
    %v820 = vunpack.c.l.b16 %v798
    %v821 = vunpack.c.l.b16 %v799
    %v822 = vunpack.c.l.b16 %v800
    %v823 = vunpack.c.l.b16 %v801
    %v824 = vunpack.c.l.b16 %v802
    %v825 = vunpack.c.l.b16 %v803
    %v826 = vunpack.c.l.b16 %v804
    %v827 = vpack.c.b16 %v820, %v819
    %v828 = vpack.c.b16 %v822, %v821
    %v829 = vpack.c.b16 %v824, %v823
    %v830 = vpack.c.b16 %v826, %v825
    %v836 = vsel %vm668, %v796, 0
    %838 = vmatprep.subr.bf16.mxu0 0
    %839 = vmatpush1.bf16.msra.mxu0 %v827
    %840 = vmatprep.subr.bf16.mxu0 0
    %841 = vmatpush1.bf16.msra.mxu0 %v828
    %842 = vmatprep.subr.bf16.mxu0 0
    %843 = vmatpush1.bf16.msra.mxu0 %v829
    %844 = vmatprep.subr.bf16.mxu0 0
    %845 = vmatpush1.bf16.msra.mxu0 %v830
    %846 = vmatprep.subr.bf16.mxu0 0
    %847 = vmatpush1.bf16.msra.mxu0 0
    %848 = vmatprep.subr.bf16.mxu0 0
    %849 = vmatpush1.bf16.msra.mxu0 0
    %850 = vmatprep.subr.bf16.mxu0 0
    %851 = vmatpush1.bf16.msra.mxu0 0
    %852 = vmatprep.subr.bf16.mxu0 0
    %853 = vmatpush1.bf16.msra.mxu0 0
    %854 = vmatprep.subr.bf16.mxu0 0
    %855 = vmatpush1.bf16.msra.mxu0 0
    %856 = vmatprep.subr.bf16.mxu0 0
    %857 = vmatpush1.bf16.msra.mxu0 0
    %858 = vmatprep.subr.bf16.mxu0 0
    %859 = vmatpush1.bf16.msra.mxu0 0
    %860 = vmatprep.subr.bf16.mxu0 0
    %861 = vmatpush1.bf16.msra.mxu0 0
    %862 = vmatprep.subr.bf16.mxu0 0
    %863 = vmatpush1.bf16.msra.mxu0 0
    %864 = vmatprep.subr.bf16.mxu0 0
    %865 = vmatpush1.bf16.msra.mxu0 0
    %866 = vmatprep.subr.bf16.mxu0 0
    %867 = vmatpush1.bf16.msra.mxu0 0
    %868 = vmatprep.subr.bf16.mxu0 0
    %869 = vmatpush1.bf16.msra.mxu0 0
    %870 = vmatprep.mubr.bf16.mxu0 0
    %871 = vmatmul.mubr.bf16.gmra.mrb[0].mxu0 %v836
    %v872 = vpop.f32.mrb[0].mxu0
    %v873 = vadd.f32 %v809, %v872
    %v874 = vpop.f32.mrb[0].mxu0
    %v875 = vpop.f32.mrb[0].mxu0
    %v876 = vpop.f32.mrb[0].mxu0
    %877 = vdwg.mxu0
    %vm878 = vcmask 80896
    %v879 = vsel %vm878, %v873, -inf
    %880 = vmax.xlane.f32.xlu0 %v879
    %v881 = vpop.xlane.xlu0 %880
    %v882 = vsub.f32 %v873, %v881
    %v883 = vmul.f32 %v882, 1.442695
    %v884 = vpow.pop %v883
    %v885 = vsel %vm878, %v884, 0.0
    %886 = vadd.xlane.f32.xlu0 %v885
    %v887 = vpop.xlane.xlu0 %886
    %v888 = vlog2.pop %v887
    %v889 = vmul.f32 %v888, 0.6931472
    %v890 = vsub.f32 %v882, %v889
    %891 = vst.msk [vmem:[#allocation2] sm:$0xff] %vm878, %v890
    // Predicated region
    $region38: #{tpu_custom_call.1} parent=1 // pred_check
      _
    $region39: #{tpu_custom_call.1} parent=1 // pred_check_branch
      %893 = sbr.rel (0) target = $region41
    $region40: #{tpu_custom_call.1} parent=1 // pred_region
      %s895 = ssub.s32 128, 128
      %896 = vsyncadd [#allocation3], %s895
      %s898 = sshll.u32 [#allocation2], 4
      %s899 = int_to_ptr.vmem [resolvable:$true] %s898
      %901 = dma.vmem_to_hbm [thread:$0]  %s899, 128, %s9, [#allocation3]
    $region41: #{tpu_custom_call.1} parent=1 // pred_fallthru
      _
    // Predicated region
    $region42: #{tpu_custom_call.1} parent=1 // pred_check
      _
    $region43: #{tpu_custom_call.1} parent=1 // pred_check_branch
      %903 = sbr.rel (0) target = $region45
    $region44: #{tpu_custom_call.1} parent=1 // pred_region
      %904 = dma.done [#allocation3], 128
    $region45: #{tpu_custom_call.1} parent=1 // pred_fallthru
      _
    %905 = vsyncpa [#allocation3], 1

</llo_original>
